<compile_context>
chip_gen: v5e
topology: v5e:2x2
jax: 0.10.0
libtpu: 0.0.40
codegen_flags: <defaults>
</compile_context>

<pallas_src>
import functools

import jax
import jax.numpy as jnp
from jax.experimental import pallas as pl
from jax.experimental.pallas import tpu as pltpu

BN_EPS = 2e-5
HIDDEN = 16  # fixed by the PyTorch module (Linear(in,16), Linear(16,16), ...)


# -----------------------------------------------------------------------------
# Kernel: one grid step == one RBT block applied to its whole batch.
# -----------------------------------------------------------------------------
def _rbt_fused_kernel(feat_ref, w1_ref, w2_ref, w3_ref, pslab_ref, smat_ref,
                      out_ref, *, compute_dtype):
    n = feat_ref.shape[1]
    ph = w1_ref.shape[2]            # P * hidden
    po = w3_ref.shape[2]            # P * out_planes

    x = feat_ref[0].astype(jnp.float32)       # (N, in): whole batch of this group
    slab = pslab_ref[0].astype(jnp.float32)   # (9, width) per-channel params
    inv_n = jnp.float32(1.0 / n)
    # Hoisted: reused by all three BN layers (JAX does not CSE broadcasts).
    ones_row = jnp.ones((1, n), jnp.float32)

    def mm(a, b):
        return jnp.dot(a.astype(compute_dtype), b.astype(compute_dtype),
                       preferred_element_type=jnp.float32)

    def bn_prelu(h, row0, width):
        # Rows row0..row0+2 hold (gamma, beta, alpha).  The slices are exact
        # (width == h.shape[1]), so the slab's zero lane-padding never enters
        # the math (padding value is irrelevant).
        g = slab[row0 + 0:row0 + 1, :width]
        b = slab[row0 + 1:row0 + 2, :width]
        a = slab[row0 + 2:row0 + 3, :width]
        # Two-pass batch statistics (stable: mean first, then centered sumsq);
        # both cross-sample reductions run on the MXU, not the XLU.
        mean = jnp.dot(ones_row, h, preferred_element_type=jnp.float32) * inv_n
        d = h - mean
        var = jnp.dot(ones_row, d * d, preferred_element_type=jnp.float32) * inv_n
        # Folded BN affine: y = d * scale + beta  (2 VALU ops/elem instead of 4).
        scale = g * jax.lax.rsqrt(var + BN_EPS)
        y = d * scale + b
        return jnp.where(y >= 0, y, a * y)

    h = mm(x, w1_ref[0])            # (N, P*hidden)  concatenated per-path W1
    h = bn_prelu(h, 0, ph)
    h = mm(h, w2_ref[0])            # (N, P*hidden)  block-diagonal W2
    h = bn_prelu(h, 3, ph)
    h = mm(h, w3_ref[0])            # (N, P*out)     block-diagonal W3
    h = bn_prelu(h, 6, po)          # per-path BN3/PReLU3 BEFORE the path sum

    # Path sum on the MXU (S = vertically stacked identities) + residual.
    paths = jnp.dot(h.astype(compute_dtype), smat_ref[...].astype(compute_dtype),
                    preferred_element_type=jnp.float32)
    out_ref[0] = (x + paths).astype(out_ref.dtype)


# -----------------------------------------------------------------------------
# Host-side weight packing (call ONCE per weight update, not per step)
# -----------------------------------------------------------------------------
def _block_diag(blocks):
    rows = sum(b.shape[0] for b in blocks)
    cols = sum(b.shape[1] for b in blocks)
    out = jnp.zeros((rows, cols), blocks[0].dtype)
    r = c = 0
    for b in blocks:
        out = out.at[r:r + b.shape[0], c:c + b.shape[1]].set(b)
        r += b.shape[0]
        c += b.shape[1]
    return out


def pack_rbt_params(params, num_paths, hidden=HIDDEN):
    """Pack one RBT block's per-path params into the fused kernel layout.

    NOTE: block-diagonal W2/W3 stay a single MXU pass while P*hidden <= 128
    (v5e) / 256 (v6e/v7x); at hidden=16 that is P <= 8 / 16, so P <= 4 is free.
    """
    p = num_paths
    in_planes = params["w1"].shape[1]
    out_planes = params["w3"].shape[2]
    ph, po = p * hidden, p * out_planes
    width = max(ph, po)

    # (P, in, hidden) -> (in, P*hidden): per-path W1 concatenated along out dim.
    w1cat = jnp.transpose(params["w1"], (1, 0, 2)).reshape(in_planes, ph)
    w2blk = _block_diag([params["w2"][i] for i in range(p)])   # (P*hidden, P*hidden)
    w3blk = _block_diag([params["w3"][i] for i in range(p)])   # (P*hidden, P*out)

    def row(name):
        v = params[name].reshape(-1).astype(jnp.float32)       # path-major concat
        return jnp.pad(v, (0, width - v.shape[0]))             # pad is never read

    pslab = jnp.stack([row("g1"), row("b1"), row("a1"),
                       row("g2"), row("b2"), row("a2"),
                       row("g3"), row("b3"), row("a3")])        # (9, width)

    # Stacked identity: sums the P per-path outputs on the MXU.
    smat = jnp.tile(jnp.eye(out_planes, dtype=jnp.float32), (p, 1))  # (P*out, out)
    return w1cat, w2blk, w3blk, pslab, smat


def stack_packed(packed_list):
    """Stack packed params of G independent blocks along the grid axis."""
    w1 = jnp.stack([pk[0] for pk in packed_list])
    w2 = jnp.stack([pk[1] for pk in packed_list])
    w3 = jnp.stack([pk[2] for pk in packed_list])
    ps = jnp.stack([pk[3] for pk in packed_list])
    smat = packed_list[0][4]   # identical for all blocks with equal (P, out)
    return w1, w2, w3, ps, smat


# -----------------------------------------------------------------------------
# Generation-aware VMEM budget: exact (8,128) padded accounting, capped.
# -----------------------------------------------------------------------------
def _pad_to(x, m):
    return -(-x // m) * m


def _vmem_limit_bytes(n, in_planes, out_planes, num_paths, hidden=HIDDEN):
    ph = num_paths * hidden
    po = num_paths * out_planes
    width = max(ph, po)

    def tile_bytes(r, c, b=4):   # (8,128)-padded f32 tile
        return _pad_to(max(r, 1), 8) * _pad_to(max(c, 1), 128) * b

    per_step_blocks = (
        tile_bytes(n, in_planes) + tile_bytes(n, out_planes)        # feat, out
        + tile_bytes(in_planes, ph) + tile_bytes(ph, ph)            # W1, W2
        + tile_bytes(ph, po)                                        # W3
        + tile_bytes(9, width) + tile_bytes(po, out_planes)         # pslab, S
    )
    want = 2 * per_step_blocks   # BlockSpec double-buffers grid-tiled operands
    # f32 intermediates live inside one step: x, two hidden acts, widest act.
    want += tile_bytes(n, in_planes) + 2 * tile_bytes(n, ph) + tile_bytes(n, po)
    want = int(1.5 * want)       # ~1.5x safety over exact padded accounting

    try:
        cap = int(0.8 * pltpu.get_tpu_info().vmem_capacity_bytes)
    except Exception:            # off-device tracing etc.
        cap = int(0.8 * (64 << 20))   # most conservative generation (v7x: 64 MiB/TC)
    return max(4 << 20, min(want, cap))


# -----------------------------------------------------------------------------
# Wrappers
# -----------------------------------------------------------------------------
def rbt_forward(feats, packed, *, compute_dtype=jnp.float32):
    """feats: (G, N, in).  packed: stack_packed([...pack_rbt_params...])."""
    w1, w2, w3, pslab, smat = packed
    g, n, in_planes = feats.shape
    ph = w1.shape[2]
    po = w3.shape[2]
    out_planes = smat.shape[1]
    width = pslab.shape[2]
    assert in_planes == out_planes, "residual add requires in_planes == out_planes"
    num_paths = po // out_planes

    kernel = functools.partial(_rbt_fused_kernel, compute_dtype=compute_dtype)

    return pl.pallas_call(
        kernel,
        out_shape=jax.ShapeDtypeStruct((g, n, out_planes), feats.dtype),
        grid_spec=pltpu.PrefetchScalarGridSpec(
            num_scalar_prefetch=0,
            grid=(g,),
            in_specs=[
                pl.BlockSpec((1, n, in_planes), lambda i: (i, 0, 0)),
                pl.BlockSpec((1, in_planes, ph), lambda i: (i, 0, 0)),
                pl.BlockSpec((1, ph, ph), lambda i: (i, 0, 0)),
                pl.BlockSpec((1, ph, po), lambda i: (i, 0, 0)),
                pl.BlockSpec((1, 9, width), lambda i: (i, 0, 0)),
                pl.BlockSpec((po, out_planes), lambda i: (0, 0)),   # shared S
            ],
            out_specs=pl.BlockSpec((1, n, out_planes), lambda i: (i, 0, 0)),
        ),
        compiler_params=pltpu.CompilerParams(
            dimension_semantics=("parallel",),
            vmem_limit_bytes=_vmem_limit_bytes(
                n, in_planes, out_planes, num_paths)),
    )(feats, w1, w2, w3, pslab, smat)


def rbt_block(feat, params, num_paths, hidden=HIDDEN, *, compute_dtype=jnp.float32):
    """Single-module convenience wrapper: feat (N, D), unpacked params.

    Packing is a per-weight-update cost; for per-step use, pack once and call
    rbt_forward directly.
    """
    if num_paths == 0:
        return feat
    packed = stack_packed([pack_rbt_params(params, num_paths, hidden)])
    return rbt_forward(feat[None], packed, compute_dtype=compute_dtype)[0]


# -----------------------------------------------------------------------------
# Synthetic parameters + pure-JAX reference (sanity checking)
# -----------------------------------------------------------------------------
def init_rbt_params(key, in_planes, out_planes, num_paths=4, hidden=HIDDEN):
    ks = jax.random.split(key, 12)
    p = num_paths

    def nrm(k, shape, scale):
        return scale * jax.random.normal(k, shape, jnp.float32)

    return {
        # nn.Linear(bias=False) weights, stored (in, out).
        "w1": nrm(ks[0], (p, in_planes, hidden), 0.1),
        "w2": nrm(ks[1], (p, hidden, hidden), 0.1),
        "w3": nrm(ks[2], (p, hidden, out_planes), 0.1),
        # BatchNorm1d affine (PyTorch init gamma=1, beta=0) perturbed so the
        # test exercises the folded scale/shift path of a *trained* module.
        "g1": 1.0 + nrm(ks[3], (p, hidden), 0.1),
        "b1": nrm(ks[4], (p, hidden), 0.1),
        "g2": 1.0 + nrm(ks[5], (p, hidden), 0.1),
        "b2": nrm(ks[6], (p, hidden), 0.1),
        "g3": 1.0 + nrm(ks[7], (p, out_planes), 0.1),
        "b3": nrm(ks[8], (p, out_planes), 0.1),
        # PReLU per-channel slope (PyTorch init 0.25), likewise perturbed.
        "a1": 0.25 + nrm(ks[9], (p, hidden), 0.05),
        "a2": 0.25 + nrm(ks[10], (p, hidden), 0.05),
        "a3": 0.25 + nrm(ks[11], (p, out_planes), 0.05),
    }


def _bn_prelu_ref(h, gamma, beta, alpha):
    mean = jnp.mean(h, axis=0, keepdims=True)
    var = jnp.mean((h - mean) ** 2, axis=0, keepdims=True)   # biased, training mode
    y = (h - mean) * jax.lax.rsqrt(var + BN_EPS) * gamma[None, :] + beta[None, :]
    return jnp.where(y >= 0, y, alpha[None, :] * y)


def rbt_reference(feat, params, num_paths):
    out = feat
    for p in range(num_paths):
        h = feat @ params["w1"][p]
        h = _bn_prelu_ref(h, params["g1"][p], params["b1"][p], params["a1"][p])
        h = h @ params["w2"][p]
        h = _bn_prelu_ref(h, params["g2"][p], params["b2"][p], params["a2"][p])
        h = h @ params["w3"][p]
        h = _bn_prelu_ref(h, params["g3"][p], params["b3"][p], params["a3"][p])
        out = out + h
    return out


if __name__ == "__main__":
    key = jax.random.PRNGKey(0)
    k_feat, k_par, k_grp = jax.random.split(key, 3)

    batch = 8
    in_planes = out_planes = 32   # residual add requires in_planes == out_planes
    num_paths = 4

    feat = jax.random.normal(k_feat, (batch, in_planes), jnp.float32)
    params = init_rbt_params(k_par, in_planes, out_planes, num_paths)

    # --- single RBTBlock (the PyTorch module), f32 ---
    out = jax.block_until_ready(rbt_block(feat, params, num_paths))
    ref = rbt_reference(feat, params, num_paths)
    assert out.shape == (batch, out_planes)
    assert bool(jnp.all(jnp.isfinite(out)))
    assert bool(jnp.allclose(out, ref, atol=1e-4, rtol=1e-4))

    # --- G independent blocks batched into ONE pallas_call (parallel grid) ---
    G = 3
    gkeys = jax.random.split(k_grp, 2 * G)
    feats = jnp.stack([jax.random.normal(gkeys[2 * i], (batch, in_planes),
                                         jnp.float32) for i in range(G)])
    plist = [init_rbt_params(gkeys[2 * i + 1], in_planes, out_planes, num_paths)
             for i in range(G)]
    packed = stack_packed([pack_rbt_params(p, num_paths) for p in plist])
    outs = jax.block_until_ready(rbt_forward(feats, packed))
    refs = jnp.stack([rbt_reference(feats[i], plist[i], num_paths)
                      for i in range(G)])
    assert outs.shape == (G, batch, out_planes)
    assert bool(jnp.allclose(outs, refs, atol=1e-4, rtol=1e-4))

    # --- bf16 matmul operands (v6e/v7x MXU fast path); stats stay f32 ---
    out_bf16 = jax.block_until_ready(
        rbt_block(feat, params, num_paths, compute_dtype=jnp.bfloat16))
    assert bool(jnp.all(jnp.isfinite(out_bf16)))
    assert float(jnp.max(jnp.abs(out_bf16 - out))) < 0.5   # coarse sanity only

    print("KERNEL_OK")
</pallas_src>

<mosaic_0001>
module attributes {stable_mosaic.version = 11 : i64} {
  func.func @_rbt_fused_kernel(%arg0: i32, %arg1: memref<1x8x32xf32, #tpu.memory_space<vmem>>, %arg2: memref<1x32x64xf32, #tpu.memory_space<vmem>>, %arg3: memref<1x64x64xf32, #tpu.memory_space<vmem>>, %arg4: memref<1x64x128xf32, #tpu.memory_space<vmem>>, %arg5: memref<1x9x128xf32, #tpu.memory_space<vmem>>, %arg6: memref<128x32xf32, #tpu.memory_space<vmem>>, %arg7: memref<1x8x32xf32, #tpu.memory_space<vmem>>) attributes {dimension_semantics = [#tpu.dimension_semantics<parallel>], iteration_bounds = array<i64: 1>, scalar_prefetch = 0 : i64, scratch_operands = 0 : i64, tpu.core_type = #tpu.core_type<tc>, window_params = [{transform_indices = @transform_0, window_bounds = array<i64: 1, 8, 32>}, {transform_indices = @transform_1, window_bounds = array<i64: 1, 32, 64>}, {transform_indices = @transform_2, window_bounds = array<i64: 1, 64, 64>}, {transform_indices = @transform_3, window_bounds = array<i64: 1, 64, 128>}, {transform_indices = @transform_4, window_bounds = array<i64: 1, 9, 128>}, {pipeline_mode = #tpu.pipeline_mode<synchronous>, transform_indices = @transform_5, window_bounds = array<i64: 128, 32>}, {transform_indices = @transform_6, window_bounds = array<i64: 1, 8, 32>}]} {
    %c0 = arith.constant 0 : index
    %c0_0 = arith.constant 0 : index
    %c0_1 = arith.constant 0 : index
    %0 = vector.load %arg1[%c0, %c0_0, %c0_1] : memref<1x8x32xf32, #tpu.memory_space<vmem>>, vector<1x8x32xf32>
    %1 = vector.shape_cast %0 : vector<1x8x32xf32> to vector<8x32xf32>
    %c0_2 = arith.constant 0 : index
    %c0_3 = arith.constant 0 : index
    %c0_4 = arith.constant 0 : index
    %2 = vector.load %arg5[%c0_2, %c0_3, %c0_4] : memref<1x9x128xf32, #tpu.memory_space<vmem>>, vector<1x9x128xf32>
    %3 = vector.shape_cast %2 : vector<1x9x128xf32> to vector<9x128xf32>
    %cst = arith.constant 1.000000e+00 : f32
    %4 = vector.broadcast %cst : f32 to vector<1x8xf32>
    %c0_5 = arith.constant 0 : index
    %c0_6 = arith.constant 0 : index
    %c0_7 = arith.constant 0 : index
    %5 = vector.load %arg2[%c0_5, %c0_6, %c0_7] : memref<1x32x64xf32, #tpu.memory_space<vmem>>, vector<1x32x64xf32>
    %6 = vector.shape_cast %5 : vector<1x32x64xf32> to vector<32x64xf32>
    %cst_8 = arith.constant dense<0.000000e+00> : vector<8x64xf32>
    %7 = tpu.matmul %1, %6, %cst_8 {dimension_numbers = #tpu.dot_dimension_numbers<[1], [0], [0], [1], [0, 0, 1, 1], [], []>} : vector<8x32xf32>, vector<32x64xf32>, vector<8x64xf32> -> vector<8x64xf32>
    %8 = vector.extract_strided_slice %3 {offsets = [0, 0], sizes = [1, 64], strides = [1, 1]} : vector<9x128xf32> to vector<1x64xf32>
    %9 = vector.extract_strided_slice %3 {offsets = [1, 0], sizes = [1, 64], strides = [1, 1]} : vector<9x128xf32> to vector<1x64xf32>
    %10 = vector.extract_strided_slice %3 {offsets = [2, 0], sizes = [1, 64], strides = [1, 1]} : vector<9x128xf32> to vector<1x64xf32>
    %cst_9 = arith.constant dense<0.000000e+00> : vector<1x64xf32>
    %11 = tpu.matmul %4, %7, %cst_9 {dimension_numbers = #tpu.dot_dimension_numbers<[1], [0], [0], [1], [0, 0, 1, 1], [], []>} : vector<1x8xf32>, vector<8x64xf32>, vector<1x64xf32> -> vector<1x64xf32>
    %cst_10 = arith.constant 1.250000e-01 : f32
    %12 = vector.broadcast %cst_10 : f32 to vector<1x64xf32>
    %13 = arith.mulf %11, %12 : vector<1x64xf32>
    %14 = vector.broadcast %13 : vector<1x64xf32> to vector<8x64xf32>
    %15 = arith.subf %7, %14 : vector<8x64xf32>
    %16 = arith.mulf %15, %15 : vector<8x64xf32>
    %cst_11 = arith.constant dense<0.000000e+00> : vector<1x64xf32>
    %17 = tpu.matmul %4, %16, %cst_11 {dimension_numbers = #tpu.dot_dimension_numbers<[1], [0], [0], [1], [0, 0, 1, 1], [], []>} : vector<1x8xf32>, vector<8x64xf32>, vector<1x64xf32> -> vector<1x64xf32>
    %cst_12 = arith.constant 1.250000e-01 : f32
    %18 = vector.broadcast %cst_12 : f32 to vector<1x64xf32>
    %19 = arith.mulf %17, %18 : vector<1x64xf32>
    %cst_13 = arith.constant 2.000000e-05 : f32
    %20 = vector.broadcast %cst_13 : f32 to vector<1x64xf32>
    %21 = arith.addf %19, %20 : vector<1x64xf32>
    %22 = math.rsqrt %21 : vector<1x64xf32>
    %23 = arith.mulf %8, %22 : vector<1x64xf32>
    %24 = vector.broadcast %23 : vector<1x64xf32> to vector<8x64xf32>
    %25 = arith.mulf %15, %24 : vector<8x64xf32>
    %26 = vector.broadcast %9 : vector<1x64xf32> to vector<8x64xf32>
    %27 = arith.addf %25, %26 : vector<8x64xf32>
    %cst_14 = arith.constant 0.000000e+00 : f32
    %28 = vector.broadcast %cst_14 : f32 to vector<8x64xf32>
    %29 = arith.cmpf oge, %27, %28 : vector<8x64xf32>
    %30 = vector.broadcast %10 : vector<1x64xf32> to vector<8x64xf32>
    %31 = arith.mulf %30, %27 : vector<8x64xf32>
    %32 = arith.select %29, %27, %31 : vector<8x64xi1>, vector<8x64xf32>
    %c0_15 = arith.constant 0 : index
    %c0_16 = arith.constant 0 : index
    %c0_17 = arith.constant 0 : index
    %33 = vector.load %arg3[%c0_15, %c0_16, %c0_17] : memref<1x64x64xf32, #tpu.memory_space<vmem>>, vector<1x64x64xf32>
    %34 = vector.shape_cast %33 : vector<1x64x64xf32> to vector<64x64xf32>
    %cst_18 = arith.constant dense<0.000000e+00> : vector<8x64xf32>
    %35 = tpu.matmul %32, %34, %cst_18 {dimension_numbers = #tpu.dot_dimension_numbers<[1], [0], [0], [1], [0, 0, 1, 1], [], []>} : vector<8x64xf32>, vector<64x64xf32>, vector<8x64xf32> -> vector<8x64xf32>
    %36 = vector.extract_strided_slice %3 {offsets = [3, 0], sizes = [1, 64], strides = [1, 1]} : vector<9x128xf32> to vector<1x64xf32>
    %37 = vector.extract_strided_slice %3 {offsets = [4, 0], sizes = [1, 64], strides = [1, 1]} : vector<9x128xf32> to vector<1x64xf32>
    %38 = vector.extract_strided_slice %3 {offsets = [5, 0], sizes = [1, 64], strides = [1, 1]} : vector<9x128xf32> to vector<1x64xf32>
    %cst_19 = arith.constant dense<0.000000e+00> : vector<1x64xf32>
    %39 = tpu.matmul %4, %35, %cst_19 {dimension_numbers = #tpu.dot_dimension_numbers<[1], [0], [0], [1], [0, 0, 1, 1], [], []>} : vector<1x8xf32>, vector<8x64xf32>, vector<1x64xf32> -> vector<1x64xf32>
    %cst_20 = arith.constant 1.250000e-01 : f32
    %40 = vector.broadcast %cst_20 : f32 to vector<1x64xf32>
    %41 = arith.mulf %39, %40 : vector<1x64xf32>
    %42 = vector.broadcast %41 : vector<1x64xf32> to vector<8x64xf32>
    %43 = arith.subf %35, %42 : vector<8x64xf32>
    %44 = arith.mulf %43, %43 : vector<8x64xf32>
    %cst_21 = arith.constant dense<0.000000e+00> : vector<1x64xf32>
    %45 = tpu.matmul %4, %44, %cst_21 {dimension_numbers = #tpu.dot_dimension_numbers<[1], [0], [0], [1], [0, 0, 1, 1], [], []>} : vector<1x8xf32>, vector<8x64xf32>, vector<1x64xf32> -> vector<1x64xf32>
    %cst_22 = arith.constant 1.250000e-01 : f32
    %46 = vector.broadcast %cst_22 : f32 to vector<1x64xf32>
    %47 = arith.mulf %45, %46 : vector<1x64xf32>
    %cst_23 = arith.constant 2.000000e-05 : f32
    %48 = vector.broadcast %cst_23 : f32 to vector<1x64xf32>
    %49 = arith.addf %47, %48 : vector<1x64xf32>
    %50 = math.rsqrt %49 : vector<1x64xf32>
    %51 = arith.mulf %36, %50 : vector<1x64xf32>
    %52 = vector.broadcast %51 : vector<1x64xf32> to vector<8x64xf32>
    %53 = arith.mulf %43, %52 : vector<8x64xf32>
    %54 = vector.broadcast %37 : vector<1x64xf32> to vector<8x64xf32>
    %55 = arith.addf %53, %54 : vector<8x64xf32>
    %cst_24 = arith.constant 0.000000e+00 : f32
    %56 = vector.broadcast %cst_24 : f32 to vector<8x64xf32>
    %57 = arith.cmpf oge, %55, %56 : vector<8x64xf32>
    %58 = vector.broadcast %38 : vector<1x64xf32> to vector<8x64xf32>
    %59 = arith.mulf %58, %55 : vector<8x64xf32>
    %60 = arith.select %57, %55, %59 : vector<8x64xi1>, vector<8x64xf32>
    %c0_25 = arith.constant 0 : index
    %c0_26 = arith.constant 0 : index
    %c0_27 = arith.constant 0 : index
    %61 = vector.load %arg4[%c0_25, %c0_26, %c0_27] : memref<1x64x128xf32, #tpu.memory_space<vmem>>, vector<1x64x128xf32>
    %62 = vector.shape_cast %61 : vector<1x64x128xf32> to vector<64x128xf32>
    %cst_28 = arith.constant dense<0.000000e+00> : vector<8x128xf32>
    %63 = tpu.matmul %60, %62, %cst_28 {dimension_numbers = #tpu.dot_dimension_numbers<[1], [0], [0], [1], [0, 0, 1, 1], [], []>} : vector<8x64xf32>, vector<64x128xf32>, vector<8x128xf32> -> vector<8x128xf32>
    %64 = vector.extract_strided_slice %3 {offsets = [6, 0], sizes = [1, 128], strides = [1, 1]} : vector<9x128xf32> to vector<1x128xf32>
    %65 = vector.extract_strided_slice %3 {offsets = [7, 0], sizes = [1, 128], strides = [1, 1]} : vector<9x128xf32> to vector<1x128xf32>
    %66 = vector.extract_strided_slice %3 {offsets = [8, 0], sizes = [1, 128], strides = [1, 1]} : vector<9x128xf32> to vector<1x128xf32>
    %cst_29 = arith.constant dense<0.000000e+00> : vector<1x128xf32>
    %67 = tpu.matmul %4, %63, %cst_29 {dimension_numbers = #tpu.dot_dimension_numbers<[1], [0], [0], [1], [0, 0, 1, 1], [], []>} : vector<1x8xf32>, vector<8x128xf32>, vector<1x128xf32> -> vector<1x128xf32>
    %cst_30 = arith.constant 1.250000e-01 : f32
    %68 = vector.broadcast %cst_30 : f32 to vector<1x128xf32>
    %69 = arith.mulf %67, %68 : vector<1x128xf32>
    %70 = vector.broadcast %69 : vector<1x128xf32> to vector<8x128xf32>
    %71 = arith.subf %63, %70 : vector<8x128xf32>
    %72 = arith.mulf %71, %71 : vector<8x128xf32>
    %cst_31 = arith.constant dense<0.000000e+00> : vector<1x128xf32>
    %73 = tpu.matmul %4, %72, %cst_31 {dimension_numbers = #tpu.dot_dimension_numbers<[1], [0], [0], [1], [0, 0, 1, 1], [], []>} : vector<1x8xf32>, vector<8x128xf32>, vector<1x128xf32> -> vector<1x128xf32>
    %cst_32 = arith.constant 1.250000e-01 : f32
    %74 = vector.broadcast %cst_32 : f32 to vector<1x128xf32>
    %75 = arith.mulf %73, %74 : vector<1x128xf32>
    %cst_33 = arith.constant 2.000000e-05 : f32
    %76 = vector.broadcast %cst_33 : f32 to vector<1x128xf32>
    %77 = arith.addf %75, %76 : vector<1x128xf32>
    %78 = math.rsqrt %77 : vector<1x128xf32>
    %79 = arith.mulf %64, %78 : vector<1x128xf32>
    %80 = vector.broadcast %79 : vector<1x128xf32> to vector<8x128xf32>
    %81 = arith.mulf %71, %80 : vector<8x128xf32>
    %82 = vector.broadcast %65 : vector<1x128xf32> to vector<8x128xf32>
    %83 = arith.addf %81, %82 : vector<8x128xf32>
    %cst_34 = arith.constant 0.000000e+00 : f32
    %84 = vector.broadcast %cst_34 : f32 to vector<8x128xf32>
    %85 = arith.cmpf oge, %83, %84 : vector<8x128xf32>
    %86 = vector.broadcast %66 : vector<1x128xf32> to vector<8x128xf32>
    %87 = arith.mulf %86, %83 : vector<8x128xf32>
    %88 = arith.select %85, %83, %87 : vector<8x128xi1>, vector<8x128xf32>
    %c0_35 = arith.constant 0 : index
    %c0_36 = arith.constant 0 : index
    %89 = vector.load %arg6[%c0_35, %c0_36] : memref<128x32xf32, #tpu.memory_space<vmem>>, vector<128x32xf32>
    %cst_37 = arith.constant dense<0.000000e+00> : vector<8x32xf32>
    %90 = tpu.matmul %88, %89, %cst_37 {dimension_numbers = #tpu.dot_dimension_numbers<[1], [0], [0], [1], [0, 0, 1, 1], [], []>} : vector<8x128xf32>, vector<128x32xf32>, vector<8x32xf32> -> vector<8x32xf32>
    %91 = arith.addf %1, %90 : vector<8x32xf32>
    %c0_38 = arith.constant 0 : index
    %c0_39 = arith.constant 0 : index
    %c0_40 = arith.constant 0 : index
    %92 = vector.load %arg7[%c0_38, %c0_39, %c0_40] : memref<1x8x32xf32, #tpu.memory_space<vmem>>, vector<1x8x32xf32>
    %93 = vector.shape_cast %92 : vector<1x8x32xf32> to vector<8x32xf32>
    %94 = vector.shape_cast %91 : vector<8x32xf32> to vector<1x8x32xf32>
    tpu.vector_store %arg7[%c0_38, %c0_39, %c0_40], %94 {strides = array<i32>} : memref<1x8x32xf32, #tpu.memory_space<vmem>>, vector<1x8x32xf32>,
    return
  }
  func.func @transform_0(%arg0: i32) -> (i32, i32, i32) {
    %c0_i32 = arith.constant 0 : i32
    %c0_i32_0 = arith.constant 0 : i32
    %c0_i32_1 = arith.constant 0 : i32
    return %arg0, %c0_i32, %c0_i32_0 : i32, i32, i32
  }
  func.func @transform_1(%arg0: i32) -> (i32, i32, i32) {
    %c0_i32 = arith.constant 0 : i32
    %c0_i32_0 = arith.constant 0 : i32
    %c0_i32_1 = arith.constant 0 : i32
    return %arg0, %c0_i32, %c0_i32_0 : i32, i32, i32
  }
  func.func @transform_2(%arg0: i32) -> (i32, i32, i32) {
    %c0_i32 = arith.constant 0 : i32
    %c0_i32_0 = arith.constant 0 : i32
    %c0_i32_1 = arith.constant 0 : i32
    return %arg0, %c0_i32, %c0_i32_0 : i32, i32, i32
  }
  func.func @transform_3(%arg0: i32) -> (i32, i32, i32) {
    %c0_i32 = arith.constant 0 : i32
    %c0_i32_0 = arith.constant 0 : i32
    %c0_i32_1 = arith.constant 0 : i32
    return %arg0, %c0_i32, %c0_i32_0 : i32, i32, i32
  }
  func.func @transform_4(%arg0: i32) -> (i32, i32, i32) {
    %c0_i32 = arith.constant 0 : i32
    %c0_i32_0 = arith.constant 0 : i32
    %c0_i32_1 = arith.constant 0 : i32
    return %arg0, %c0_i32, %c0_i32_0 : i32, i32, i32
  }
  func.func @transform_5(%arg0: i32) -> (i32, i32) {
    %c0_i32 = arith.constant 0 : i32
    %c0_i32_0 = arith.constant 0 : i32
    %c0_i32_1 = arith.constant 0 : i32
    return %c0_i32, %c0_i32_0 : i32, i32
  }
  func.func @transform_6(%arg0: i32) -> (i32, i32, i32) {
    %c0_i32 = arith.constant 0 : i32
    %c0_i32_0 = arith.constant 0 : i32
    %c0_i32_1 = arith.constant 0 : i32
    return %arg0, %c0_i32, %c0_i32_0 : i32, i32, i32
  }
}

</mosaic_0001>

<llo_original>
// kernel: tpu_custom_call.1
$region0: #{tpu_custom_call.1}
  #allocation0 [shape = 'u32[]', space=smem, size = 0x4, offset = 0x4, fixed_abs, tag = 'smem constant byte address 0x4 - core index']
  #allocation1 [shape = 'u32[72,128]{1,0:T(1,128)}', space=vmem, size = 0x9000, scoped, tag = 'internal scratch']
  %s0 = inlined_call_operand.vmem [shape: f32[1,8,32], index: 0, kind: input, shape index: {}]
  %s1 = inlined_call_operand.vmem [shape: f32[1,32,64], index: 1, kind: input, shape index: {}]
  %s2 = inlined_call_operand.vmem [shape: f32[1,64,64], index: 2, kind: input, shape index: {}]
  %s3 = inlined_call_operand.vmem [shape: f32[1,64,128], index: 3, kind: input, shape index: {}]
  %s4 = inlined_call_operand.vmem [shape: f32[1,9,128], index: 4, kind: input, shape index: {}]
  %s5 = inlined_call_operand.vmem [shape: f32[128,32], index: 5, kind: input, shape index: {}]
  %s6 = inlined_call_operand.hbm [shape: f32[1,8,32], index: 6, kind: output, shape index: {}]
  %s7 = sld [smem:[#allocation0]]
  $region34: #{tpu_custom_call.1} parent=0
    _
  %s9 = ssub.s32 1, %s7
  %s10 = scalar_select 0, %s9, %s7
  $region1: #{tpu_custom_call.1} parent=0
    #allocation2 [shape = 'u8[4096]{0}', space=vmem, size = 0x1000, scoped, tag = 'output window, operand 0, single buffered']
    #allocation3 [shape = 's32[1]{0}', space=sflag, size = 0x4, scoped, tag = 'scoped memory for tpu_custom_call.1']
    %11 = vsyncpa [#allocation3], 0
    // Predicated region
    $region2: #{tpu_custom_call.1} parent=1 // pred_check
      _
    $region3: #{tpu_custom_call.1} parent=1 // pred_check_branch
      %13 = sbr.rel (0) target = $region5
    $region4: #{tpu_custom_call.1} parent=1 // pred_region
      _
    $region5: #{tpu_custom_call.1} parent=1 // pred_fallthru
      _
    // Predicated region
    $region6: #{tpu_custom_call.1} parent=1 // pred_check
      _
    $region7: #{tpu_custom_call.1} parent=1 // pred_check_branch
      %15 = sbr.rel (0) target = $region9
    $region8: #{tpu_custom_call.1} parent=1 // pred_region
      _
    $region9: #{tpu_custom_call.1} parent=1 // pred_fallthru
      _
    // Predicated region
    $region10: #{tpu_custom_call.1} parent=1 // pred_check
      _
    $region11: #{tpu_custom_call.1} parent=1 // pred_check_branch
      %17 = sbr.rel (0) target = $region13
    $region12: #{tpu_custom_call.1} parent=1 // pred_region
      _
    $region13: #{tpu_custom_call.1} parent=1 // pred_fallthru
      _
    // Predicated region
    $region14: #{tpu_custom_call.1} parent=1 // pred_check
      _
    $region15: #{tpu_custom_call.1} parent=1 // pred_check_branch
      %19 = sbr.rel (0) target = $region17
    $region16: #{tpu_custom_call.1} parent=1 // pred_region
      _
    $region17: #{tpu_custom_call.1} parent=1 // pred_fallthru
      _
    // Predicated region
    $region18: #{tpu_custom_call.1} parent=1 // pred_check
      _
    $region19: #{tpu_custom_call.1} parent=1 // pred_check_branch
      %21 = sbr.rel (0) target = $region21
    $region20: #{tpu_custom_call.1} parent=1 // pred_region
      _
    $region21: #{tpu_custom_call.1} parent=1 // pred_fallthru
      _
    // Predicated region
    $region22: #{tpu_custom_call.1} parent=1 // pred_check
      _
    $region23: #{tpu_custom_call.1} parent=1 // pred_check_branch
      %23 = sbr.rel (0) target = $region25
    $region24: #{tpu_custom_call.1} parent=1 // pred_region
      _
    $region25: #{tpu_custom_call.1} parent=1 // pred_fallthru
      _
    %v24 = vld [vmem:[%s0] sm:$0xff]
    %v25 = vld [vmem:[%s4] sm:$0xff]
    %v26 = vld [vmem:[%s4 + $0x8] sm:$0x1]
    %v27 = vld [vmem:[%s1] sm:$0xff]
    %v28 = vld [vmem:[%s1 + $0x8] sm:$0xff]
    %v29 = vld [vmem:[%s1 + $0x10] sm:$0xff]
    %v30 = vld [vmem:[%s1 + $0x18] sm:$0xff]
    %vm31 = vcmask 261120
    %v33 = vsel %vm31, %v24, 0
    %35 = vmatpush.msra.mxu0 0.0
    %36 = vmatpush.msra.mxu0 0.0
    %37 = vmatpush.msra.mxu0 0.0
    %38 = vmatpush.msra.mxu0 0.0
    %39 = vmatpush.msra.mxu0 0.0
    %40 = vmatpush.msra.mxu0 0.0
    %41 = vmatpush.msra.mxu0 0.0
    %42 = vmatpush.msra.mxu0 0.0
    %43 = vmatpush.msra.mxu0 0.0
    %44 = vmatpush.msra.mxu0 0.0
    %45 = vmatpush.msra.mxu0 0.0
    %46 = vmatpush.msra.mxu0 0.0
    %47 = vmatpush.msra.mxu0 %v30
    %48 = vmatpush.msra.mxu0 %v29
    %49 = vmatpush.msra.mxu0 %v28
    %50 = vmatpush.msra.mxu0 %v27
    %51 = vmatmul.f32.gmra.mxu0 %v33
    %v52 = vpop.f32.mrf.mxu0
    %v53 = vadd.f32 0.0, %v52
    %54 = vdwg.mxu0
    %vm55 = vcmask 64512
    %v57 = vsel %vm55, 1.0, 0
    %59 = vmatpush.msra.mxu0 0.0
    %60 = vmatpush.msra.mxu0 0.0
    %61 = vmatpush.msra.mxu0 0.0
    %62 = vmatpush.msra.mxu0 0.0
    %63 = vmatpush.msra.mxu0 0.0
    %64 = vmatpush.msra.mxu0 0.0
    %65 = vmatpush.msra.mxu0 0.0
    %66 = vmatpush.msra.mxu0 0.0
    %67 = vmatpush.msra.mxu0 0.0
    %68 = vmatpush.msra.mxu0 0.0
    %69 = vmatpush.msra.mxu0 0.0
    %70 = vmatpush.msra.mxu0 0.0
    %71 = vmatpush.msra.mxu0 0.0
    %72 = vmatpush.msra.mxu0 0.0
    %73 = vmatpush.msra.mxu0 0.0
    %74 = vmatpush.msra.mxu0 %v53
    %75 = vmatmul.f32.gmra.mxu0 %v57
    %v76 = vpop.f32.mrf.mxu0
    %v77 = vadd.f32 0.0, %v76
    %78 = vdwg.mxu0
    %v79 = vmul.f32 %v77, 0.125
    %v80 = vperm.slane %v79, 0
    %v81 = vsub.f32 %v53, %v80
    %v82 = vmul.f32 %v81, %v81
    %83 = vmatpush.msra.mxu0 0.0
    %84 = vmatpush.msra.mxu0 0.0
    %85 = vmatpush.msra.mxu0 0.0
    %86 = vmatpush.msra.mxu0 0.0
    %87 = vmatpush.msra.mxu0 0.0
    %88 = vmatpush.msra.mxu0 0.0
    %89 = vmatpush.msra.mxu0 0.0
    %90 = vmatpush.msra.mxu0 0.0
    %91 = vmatpush.msra.mxu0 0.0
    %92 = vmatpush.msra.mxu0 0.0
    %93 = vmatpush.msra.mxu0 0.0
    %94 = vmatpush.msra.mxu0 0.0
    %95 = vmatpush.msra.mxu0 0.0
    %96 = vmatpush.msra.mxu0 0.0
    %97 = vmatpush.msra.mxu0 0.0
    %98 = vmatpush.msra.mxu0 %v82
    %99 = vmatmul.f32.gmra.mxu0 %v57
    %v100 = vpop.f32.mrf.mxu0
    %v101 = vadd.f32 0.0, %v100
    %102 = vdwg.mxu0
    %v103 = vmul.f32 %v101, 0.125
    %v104 = vadd.f32 %v103, 2e-05
    %v105 = vrsqrt.pop %v104
    %v106 = vmul.f32 %v105, %v104
    %v107 = vmul.f32 %v106, %v105
    %v108 = vmul.f32 0.5, %v107
    %v109 = vsub.f32 1.5, %v108
    %v110 = vmul.f32 %v105, %v109
    %vm111 = vweird.f32 %v104
    %vm112 = vweird.f32 %v105
    %vm113 = vmor %vm111, %vm112
    %v114 = vsel %vm113, %v105, %v110
    %v115 = vmul.f32 %v25, %v114
    %v116 = vperm.slane %v115, 0
    %v117 = vmul.f32 %v81, %v116
    %v118 = vperm.slane %v25, 1
    %v119 = vadd.f32 %v117, %v118
    %vm120 = vcmp.ge.f32.partialorder %v119, 0.0
    %v121 = vperm.slane %v25, 2
    %v122 = vmul.f32 %v121, %v119
    %v123 = vsel %vm120, %v119, %v122
    %v124 = vld [vmem:[%s2] sm:$0xff]
    %v125 = vld [vmem:[%s2 + $0x8] sm:$0xff]
    %v126 = vld [vmem:[%s2 + $0x10] sm:$0xff]
    %v127 = vld [vmem:[%s2 + $0x18] sm:$0xff]
    %v128 = vld [vmem:[%s2 + $0x20] sm:$0xff]
    %v129 = vld [vmem:[%s2 + $0x28] sm:$0xff]
    %v130 = vld [vmem:[%s2 + $0x30] sm:$0xff]
    %v131 = vld [vmem:[%s2 + $0x38] sm:$0xff]
    %vm132 = vcmask 523264
    %v134 = vsel %vm132, %v123, 0
    %136 = vmatpush.msra.mxu0 0.0
    %137 = vmatpush.msra.mxu0 0.0
    %138 = vmatpush.msra.mxu0 0.0
    %139 = vmatpush.msra.mxu0 0.0
    %140 = vmatpush.msra.mxu0 0.0
    %141 = vmatpush.msra.mxu0 0.0
    %142 = vmatpush.msra.mxu0 0.0
    %143 = vmatpush.msra.mxu0 0.0
    %144 = vmatpush.msra.mxu0 %v131
    %145 = vmatpush.msra.mxu0 %v130
    %146 = vmatpush.msra.mxu0 %v129
    %147 = vmatpush.msra.mxu0 %v128
    %148 = vmatpush.msra.mxu0 %v127
    %149 = vmatpush.msra.mxu0 %v126
    %150 = vmatpush.msra.mxu0 %v125
    %151 = vmatpush.msra.mxu0 %v124
    %152 = vmatmul.f32.gmra.mxu0 %v134
    %v153 = vpop.f32.mrf.mxu0
    %v154 = vadd.f32 0.0, %v153
    %155 = vdwg.mxu0
    %156 = vmatpush.msra.mxu0 0.0
    %157 = vmatpush.msra.mxu0 0.0
    %158 = vmatpush.msra.mxu0 0.0
    %159 = vmatpush.msra.mxu0 0.0
    %160 = vmatpush.msra.mxu0 0.0
    %161 = vmatpush.msra.mxu0 0.0
    %162 = vmatpush.msra.mxu0 0.0
    %163 = vmatpush.msra.mxu0 0.0
    %164 = vmatpush.msra.mxu0 0.0
    %165 = vmatpush.msra.mxu0 0.0
    %166 = vmatpush.msra.mxu0 0.0
    %167 = vmatpush.msra.mxu0 0.0
    %168 = vmatpush.msra.mxu0 0.0
    %169 = vmatpush.msra.mxu0 0.0
    %170 = vmatpush.msra.mxu0 0.0
    %171 = vmatpush.msra.mxu0 %v154
    %172 = vmatmul.f32.gmra.mxu0 %v57
    %v173 = vpop.f32.mrf.mxu0
    %v174 = vadd.f32 0.0, %v173
    %175 = vdwg.mxu0
    %v176 = vmul.f32 %v174, 0.125
    %v177 = vperm.slane %v176, 0
    %v178 = vsub.f32 %v154, %v177
    %v179 = vmul.f32 %v178, %v178
    %180 = vmatpush.msra.mxu0 0.0
    %181 = vmatpush.msra.mxu0 0.0
    %182 = vmatpush.msra.mxu0 0.0
    %183 = vmatpush.msra.mxu0 0.0
    %184 = vmatpush.msra.mxu0 0.0
    %185 = vmatpush.msra.mxu0 0.0
    %186 = vmatpush.msra.mxu0 0.0
    %187 = vmatpush.msra.mxu0 0.0
    %188 = vmatpush.msra.mxu0 0.0
    %189 = vmatpush.msra.mxu0 0.0
    %190 = vmatpush.msra.mxu0 0.0
    %191 = vmatpush.msra.mxu0 0.0
    %192 = vmatpush.msra.mxu0 0.0
    %193 = vmatpush.msra.mxu0 0.0
    %194 = vmatpush.msra.mxu0 0.0
    %195 = vmatpush.msra.mxu0 %v179
    %196 = vmatmul.f32.gmra.mxu0 %v57
    %v197 = vpop.f32.mrf.mxu0
    %v198 = vadd.f32 0.0, %v197
    %199 = vdwg.mxu0
    %v200 = vmul.f32 %v198, 0.125
    %v201 = vadd.f32 %v200, 2e-05
    %v202 = vrsqrt.pop %v201
    %v203 = vmul.f32 %v202, %v201
    %v204 = vmul.f32 %v203, %v202
    %v205 = vmul.f32 0.5, %v204
    %v206 = vsub.f32 1.5, %v205
    %v207 = vmul.f32 %v202, %v206
    %vm208 = vweird.f32 %v201
    %vm209 = vweird.f32 %v202
    %vm210 = vmor %vm208, %vm209
    %v211 = vsel %vm210, %v202, %v207
    %v213 = vrot.slane %v211, 5
    %v215 = vmul.f32 %v25, %v213
    %v216 = vperm.slane %v215, 3
    %v217 = vmul.f32 %v178, %v216
    %v218 = vperm.slane %v25, 4
    %v219 = vadd.f32 %v217, %v218
    %vm220 = vcmp.ge.f32.partialorder %v219, 0.0
    %v221 = vperm.slane %v25, 5
    %v222 = vmul.f32 %v221, %v219
    %v223 = vsel %vm220, %v219, %v222
    %v224 = vld [vmem:[%s3] sm:$0xff]
    %v225 = vld [vmem:[%s3 + $0x8] sm:$0xff]
    %v226 = vld [vmem:[%s3 + $0x10] sm:$0xff]
    %v227 = vld [vmem:[%s3 + $0x18] sm:$0xff]
    %v228 = vld [vmem:[%s3 + $0x20] sm:$0xff]
    %v229 = vld [vmem:[%s3 + $0x28] sm:$0xff]
    %v230 = vld [vmem:[%s3 + $0x30] sm:$0xff]
    %v231 = vld [vmem:[%s3 + $0x38] sm:$0xff]
    %v233 = vsel %vm132, %v223, 0
    %235 = vmatpush.msra.mxu0 0.0
    %236 = vmatpush.msra.mxu0 0.0
    %237 = vmatpush.msra.mxu0 0.0
    %238 = vmatpush.msra.mxu0 0.0
    %239 = vmatpush.msra.mxu0 0.0
    %240 = vmatpush.msra.mxu0 0.0
    %241 = vmatpush.msra.mxu0 0.0
    %242 = vmatpush.msra.mxu0 0.0
    %243 = vmatpush.msra.mxu0 %v231
    %244 = vmatpush.msra.mxu0 %v230
    %245 = vmatpush.msra.mxu0 %v229
    %246 = vmatpush.msra.mxu0 %v228
    %247 = vmatpush.msra.mxu0 %v227
    %248 = vmatpush.msra.mxu0 %v226
    %249 = vmatpush.msra.mxu0 %v225
    %250 = vmatpush.msra.mxu0 %v224
    %251 = vmatmul.f32.gmra.mxu0 %v233
    %v252 = vpop.f32.mrf.mxu0
    %v253 = vadd.f32 0.0, %v252
    %254 = vdwg.mxu0
    %255 = vmatpush.msra.mxu0 0.0
    %256 = vmatpush.msra.mxu0 0.0
    %257 = vmatpush.msra.mxu0 0.0
    %258 = vmatpush.msra.mxu0 0.0
    %259 = vmatpush.msra.mxu0 0.0
    %260 = vmatpush.msra.mxu0 0.0
    %261 = vmatpush.msra.mxu0 0.0
    %262 = vmatpush.msra.mxu0 0.0
    %263 = vmatpush.msra.mxu0 0.0
    %264 = vmatpush.msra.mxu0 0.0
    %265 = vmatpush.msra.mxu0 0.0
    %266 = vmatpush.msra.mxu0 0.0
    %267 = vmatpush.msra.mxu0 0.0
    %268 = vmatpush.msra.mxu0 0.0
    %269 = vmatpush.msra.mxu0 0.0
    %270 = vmatpush.msra.mxu0 %v253
    %271 = vmatmul.f32.gmra.mxu0 %v57
    %v272 = vpop.f32.mrf.mxu0
    %v273 = vadd.f32 0.0, %v272
    %274 = vdwg.mxu0
    %v275 = vmul.f32 %v273, 0.125
    %v276 = vperm.slane %v275, 0
    %v277 = vsub.f32 %v253, %v276
    %v278 = vmul.f32 %v277, %v277
    %279 = vmatpush.msra.mxu0 0.0
    %280 = vmatpush.msra.mxu0 0.0
    %281 = vmatpush.msra.mxu0 0.0
    %282 = vmatpush.msra.mxu0 0.0
    %283 = vmatpush.msra.mxu0 0.0
    %284 = vmatpush.msra.mxu0 0.0
    %285 = vmatpush.msra.mxu0 0.0
    %286 = vmatpush.msra.mxu0 0.0
    %287 = vmatpush.msra.mxu0 0.0
    %288 = vmatpush.msra.mxu0 0.0
    %289 = vmatpush.msra.mxu0 0.0
    %290 = vmatpush.msra.mxu0 0.0
    %291 = vmatpush.msra.mxu0 0.0
    %292 = vmatpush.msra.mxu0 0.0
    %293 = vmatpush.msra.mxu0 0.0
    %294 = vmatpush.msra.mxu0 %v278
    %295 = vmatmul.f32.gmra.mxu0 %v57
    %v296 = vpop.f32.mrf.mxu0
    %v297 = vadd.f32 0.0, %v296
    %298 = vdwg.mxu0
    %v299 = vmul.f32 %v297, 0.125
    %v300 = vadd.f32 %v299, 2e-05
    %v301 = vrsqrt.pop %v300
    %v302 = vmul.f32 %v301, %v300
    %v303 = vmul.f32 %v302, %v301
    %v304 = vmul.f32 0.5, %v303
    %v305 = vsub.f32 1.5, %v304
    %v306 = vmul.f32 %v301, %v305
    %vm307 = vweird.f32 %v300
    %vm308 = vweird.f32 %v301
    %vm309 = vmor %vm307, %vm308
    %v310 = vsel %vm309, %v301, %v306
    %v312 = vrot.slane %v310, 2
    %v314 = vmul.f32 %v25, %v312
    %v315 = vperm.slane %v314, 6
    %v316 = vmul.f32 %v277, %v315
    %v317 = vperm.slane %v25, 7
    %v318 = vadd.f32 %v316, %v317
    %vm319 = vcmp.ge.f32.partialorder %v318, 0.0
    %v320 = vperm.slane %v26, 0
    %v321 = vmul.f32 %v320, %v318
    %v322 = vsel %vm319, %v318, %v321
    %v323 = vld [vmem:[%s5] sm:$0xff]
    %v324 = vld [vmem:[%s5 + $0x8] sm:$0xff]
    %v325 = vld [vmem:[%s5 + $0x10] sm:$0xff]
    %v326 = vld [vmem:[%s5 + $0x18] sm:$0xff]
    %v327 = vld [vmem:[%s5 + $0x20] sm:$0xff]
    %v328 = vld [vmem:[%s5 + $0x28] sm:$0xff]
    %v329 = vld [vmem:[%s5 + $0x30] sm:$0xff]
    %v330 = vld [vmem:[%s5 + $0x38] sm:$0xff]
    %v331 = vld [vmem:[%s5 + $0x40] sm:$0xff]
    %v332 = vld [vmem:[%s5 + $0x48] sm:$0xff]
    %v333 = vld [vmem:[%s5 + $0x50] sm:$0xff]
    %v334 = vld [vmem:[%s5 + $0x58] sm:$0xff]
    %v335 = vld [vmem:[%s5 + $0x60] sm:$0xff]
    %v336 = vld [vmem:[%s5 + $0x68] sm:$0xff]
    %v337 = vld [vmem:[%s5 + $0x70] sm:$0xff]
    %v338 = vld [vmem:[%s5 + $0x78] sm:$0xff]
    %339 = vmatpush.msra.mxu0 %v338
    %340 = vmatpush.msra.mxu0 %v337
    %341 = vmatpush.msra.mxu0 %v336
    %342 = vmatpush.msra.mxu0 %v335
    %343 = vmatpush.msra.mxu0 %v334
    %344 = vmatpush.msra.mxu0 %v333
    %345 = vmatpush.msra.mxu0 %v332
    %346 = vmatpush.msra.mxu0 %v331
    %347 = vmatpush.msra.mxu0 %v330
    %348 = vmatpush.msra.mxu0 %v329
    %349 = vmatpush.msra.mxu0 %v328
    %350 = vmatpush.msra.mxu0 %v327
    %351 = vmatpush.msra.mxu0 %v326
    %352 = vmatpush.msra.mxu0 %v325
    %353 = vmatpush.msra.mxu0 %v324
    %354 = vmatpush.msra.mxu0 %v323
    %355 = vmatmul.f32.gmra.mxu0 %v322
    %v356 = vpop.f32.mrf.mxu0
    %v357 = vadd.f32 0.0, %v356
    %358 = vdwg.mxu0
    %v359 = vadd.f32 %v24, %v357
    %360 = vst.msk [vmem:[#allocation2] sm:$0xff] %vm31, %v359
    // Predicated region
    $region26: #{tpu_custom_call.1} parent=1 // pred_check
      _
    $region27: #{tpu_custom_call.1} parent=1 // pred_check_branch
      %362 = sbr.rel (0) target = $region29
    $region28: #{tpu_custom_call.1} parent=1 // pred_region
      %364 = vsyncadd [#allocation3], 0
      %s366 = sshll.u32 [#allocation2], 4
      %s367 = int_to_ptr.vmem [resolvable:$true] %s366
      %s368 = sshll.u32 %s6, 4
      %s369 = int_to_ptr.hbm [resolvable:$true] %s368
      %371 = dma.vmem_to_hbm [thread:$0]  %s367, 128, %s369, [#allocation3]
    $region29: #{tpu_custom_call.1} parent=1 // pred_fallthru
      _
    // Predicated region
    $region30: #{tpu_custom_call.1} parent=1 // pred_check
      _
    $region31: #{tpu_custom_call.1} parent=1 // pred_check_branch
      %373 = sbr.rel (0) target = $region33
    $region32: #{tpu_custom_call.1} parent=1 // pred_region
      %375 = dma.done [#allocation3], 128
    $region33: #{tpu_custom_call.1} parent=1 // pred_fallthru
      _
    %376 = vsyncpa [#allocation3], 1

</llo_original>
